<compile_context>
chip_gen: v6e
topology: v6e:2x2x1
jax: 0.10.0
libtpu: 0.0.40
codegen_flags: <defaults>
</compile_context>

<pallas_src>
import functools

import jax
import jax.numpy as jnp
from jax.experimental import pallas as pl
from jax.experimental.pallas import tpu as pltpu

_LANES = 128           # vreg lane width: vertex axis maps onto lanes
_TILE_M_MAX = 1024     # rows of 128 vertices per grid step (per coordinate)
_NUM_SHARDS = 2        # leading 'parallel' grid axis (v7x: 2 TensorCores)


def _round_up(x, m):
    return (x + m - 1) // m * m


def _loss_l2_kernel(p_ref, t_ref, o_ref, acc_ref, *, sx, lox, sy, sz, inv_3n):
    """One grid step.

    p_ref, t_ref : (3, tile_m, 128) coordinate-major, lane/sublane-dense blocks
    o_ref        : (1, 1, 128)  per-shard lane partial sums (written at finalize)
    acc_ref      : (1, 128) f32 running lane partial sums (VMEM scratch)
    """
    step = pl.program_id(1)

    @pl.when(step == 0)
    def _init():
        acc_ref[...] = jnp.zeros_like(acc_ref)

    f32 = jnp.float32
    p_r = p_ref[0].astype(f32)
    t_r = t_ref[0].astype(f32)
    p_phi = p_ref[1].astype(f32)
    t_phi = t_ref[1].astype(f32)
    p_z = p_ref[2].astype(f32)
    t_z = t_ref[2].astype(f32)

    # denorm radius:  r = (c + 1) * (hi - lo)/2 + lo
    r_p = (p_r + 1.0) * sx + lox
    r_t = (t_r + 1.0) * sx + lox
    # phi and z only enter through their difference -> offsets cancel.
    dphi = (p_phi - t_phi) * sy
    dz = (p_z - t_z) * sz

    # (rp sin(phi_p) - rt sin(phi_t))^2 + (rp cos(phi_p) - rt cos(phi_t))^2
    #   = rp^2 + rt^2 - 2 rp rt cos(phi_p - phi_t)     (1 EUP op, not 4)
    sq = r_p * r_p + r_t * r_t - 2.0 * (r_p * r_t) * jnp.cos(dphi) + dz * dz

    # Per-tile sublane reduce into lane partials (cross-lane reduce deferred).
    acc_ref[...] += jnp.sum(sq, axis=0, keepdims=True)

    @pl.when(step == pl.num_programs(1) - 1)
    def _finalize():
        o_ref[0] = acc_ref[...] * inv_3n


def loss_l2(preds, target, station_constraints, *, tile_m_max=_TILE_M_MAX):
    """preds, target: [N, 3] normalized coords.  Returns f32 scalar MSE loss."""
    assert preds.shape == target.shape and preds.shape[-1] == 3
    n = preds.shape[0]

    vx_lo, vx_hi = (float(v) for v in station_constraints["vx"])
    vy_lo, vy_hi = (float(v) for v in station_constraints["vy"])
    vz_lo, vz_hi = (float(v) for v in station_constraints["vz"])

    sx = (vx_hi - vx_lo) * 0.5
    sy = (vy_hi - vy_lo) * 0.5
    sz = (vz_hi - vz_lo) * 0.5
    inv_3n = 1.0 / (3.0 * n)

    # Keep bf16 inputs as bf16 (half the HBM traffic); cast to f32 in-kernel.
    dtype = preds.dtype if preds.dtype in (jnp.bfloat16, jnp.float32) else jnp.float32

    # Tiling over the vertex axis (128 vertices per lane-row).
    m = (n + _LANES - 1) // _LANES
    tile_m = min(tile_m_max, _round_up(m, 16))
    num_shards = 1 if m <= tile_m else _NUM_SHARDS
    m_pad = _round_up(m, num_shards * tile_m)
    steps = m_pad // (num_shards * tile_m)
    n_pad = m_pad * _LANES

    def relayout(x):
        # [N, 3] vertex-major -> [3, m_pad, 128] coordinate-major dense slabs.
        # preds/target are padded identically with zeros, so padded lanes give
        # r_p == r_t, dphi == dz == 0 -> contribute exactly 0 to the sum.
        # TODO(synk): have the producer emit coordinate-major data to avoid
        # this one extra relayout pass over the inputs.
        x = jnp.asarray(x, dtype)
        x = jnp.pad(x, ((0, n_pad - n), (0, 0)))
        return x.T.reshape(3, m_pad, _LANES)

    p = relayout(preds)
    t = relayout(target)

    kernel = functools.partial(
        _loss_l2_kernel, sx=sx, lox=vx_lo, sy=sy, sz=sz, inv_3n=inv_3n
    )

    in_map = lambda c, i: (0, c * steps + i, 0)
    partials = pl.pallas_call(
        kernel,
        out_shape=jax.ShapeDtypeStruct((num_shards, 1, _LANES), jnp.float32),
        grid=(num_shards, steps),
        in_specs=[
            pl.BlockSpec((3, tile_m, _LANES), in_map),
            pl.BlockSpec((3, tile_m, _LANES), in_map),
        ],
        out_specs=pl.BlockSpec((1, 1, _LANES), lambda c, i: (c, 0, 0)),
        scratch_shapes=[pltpu.VMEM((1, _LANES), jnp.float32)],
        compiler_params=pltpu.CompilerParams(
            dimension_semantics=("parallel", "arbitrary")
        ),
    )(p, t)

    # Single cross-lane reduce over the per-shard lane partials (already /3n).
    return jnp.sum(partials)


def _loss_l2_ref(preds, target, station_constraints):
    """Pure-JAX reference mirroring the PyTorch code."""
    def denorm_coord(c, lo, hi):
        return (c + 1.0) * (hi - lo) / 2.0 + lo

    def transform(v):
        r = denorm_coord(v[:, 0], *station_constraints["vx"])
        phi = denorm_coord(v[:, 1], *station_constraints["vy"])
        z = denorm_coord(v[:, 2], *station_constraints["vz"])
        return jnp.stack([r * jnp.sin(phi), r * jnp.cos(phi), z], axis=1)

    a = transform(jnp.asarray(preds, jnp.float32))
    b = transform(jnp.asarray(target, jnp.float32))
    return jnp.mean((a - b) ** 2).astype(jnp.float32)


if __name__ == "__main__":
    # Deterministic synthetic inputs and constraints (no checkpoint load).
    station_constraints = {
        "vx": (0.0, 100.0),              # radius range
        "vy": (-3.1415927, 3.1415927),   # phi range
        "vz": (-300.0, 300.0),           # z range
    }

    key = jax.random.PRNGKey(0)
    k1, k2, k3, k4 = jax.random.split(key, 4)

    # Small shape matching the module's [N, 3] vertex layout.
    n_small = 8
    p_small = jax.random.uniform(k1, (n_small, 3), minval=-1.0, maxval=1.0,
                                 dtype=jnp.float32)
    t_small = jax.random.uniform(k2, (n_small, 3), minval=-1.0, maxval=1.0,
                                 dtype=jnp.float32)

    loss = loss_l2(p_small, t_small, station_constraints)
    jax.block_until_ready(loss)
    ref = _loss_l2_ref(p_small, t_small, station_constraints)
    assert jnp.allclose(loss, ref, rtol=1e-5, atol=1e-5), (loss, ref)

    # Second size exercising the multi-step accumulator + 2-shard grid
    # (tile_m_max lowered so the grid has >1 step without a huge test array).
    n_big = 8000
    p_big = jax.random.uniform(k3, (n_big, 3), minval=-1.0, maxval=1.0,
                               dtype=jnp.float32)
    t_big = jax.random.uniform(k4, (n_big, 3), minval=-1.0, maxval=1.0,
                               dtype=jnp.float32)

    loss_big = loss_l2(p_big, t_big, station_constraints, tile_m_max=16)
    jax.block_until_ready(loss_big)
    ref_big = _loss_l2_ref(p_big, t_big, station_constraints)
    # Slightly looser rtol: f32 reduction-order differences over 24k elements.
    assert jnp.allclose(loss_big, ref_big, rtol=1e-4, atol=1e-4), (loss_big, ref_big)

    print("KERNEL_OK")
</pallas_src>

<mosaic_0001>
module attributes {stable_mosaic.version = 11 : i64} {
  func.func @_loss_l2_kernel(%arg0: i32, %arg1: i32, %arg2: memref<3x16x128xf32, #tpu.memory_space<vmem>>, %arg3: memref<3x16x128xf32, #tpu.memory_space<vmem>>, %arg4: memref<1x1x128xf32, #tpu.memory_space<vmem>>, %arg5: memref<1x128xf32, #tpu.memory_space<vmem>>) attributes {dimension_semantics = [#tpu.dimension_semantics<parallel>, #tpu.dimension_semantics<arbitrary>], iteration_bounds = array<i64: 1, 1>, scalar_prefetch = 0 : i64, scratch_operands = 1 : i64, tpu.core_type = #tpu.core_type<tc>, window_params = [{transform_indices = @transform_0, window_bounds = array<i64: 3, 16, 128>}, {transform_indices = @transform_1, window_bounds = array<i64: 3, 16, 128>}, {transform_indices = @transform_2, window_bounds = array<i64: 1, 1, 128>}]} {
    %c0_i32 = arith.constant 0 : i32
    %0 = arith.cmpi eq, %arg1, %c0_i32 : i32
    %1 = arith.extui %0 : i1 to i32
    %c0_i32_0 = arith.constant 0 : i32
    %2 = arith.cmpi ne, %1, %c0_i32_0 : i32
    scf.if %2 {
      %cst_31 = arith.constant 0.000000e+00 : f32
      %52 = vector.broadcast %cst_31 : f32 to vector<1x128xf32>
      %c0_32 = arith.constant 0 : index
      %c0_33 = arith.constant 0 : index
      %53 = vector.load %arg5[%c0_32, %c0_33] : memref<1x128xf32, #tpu.memory_space<vmem>>, vector<1x128xf32>
      tpu.vector_store %arg5[%c0_32, %c0_33], %52 {strides = array<i32>} : memref<1x128xf32, #tpu.memory_space<vmem>>, vector<1x128xf32>,
    } else {
    }
    %c0 = arith.constant 0 : index
    %c0_1 = arith.constant 0 : index
    %c0_2 = arith.constant 0 : index
    %3 = vector.load %arg2[%c0, %c0_1, %c0_2] : memref<3x16x128xf32, #tpu.memory_space<vmem>>, vector<1x16x128xf32>
    %4 = vector.shape_cast %3 : vector<1x16x128xf32> to vector<16x128xf32>
    %c0_3 = arith.constant 0 : index
    %c0_4 = arith.constant 0 : index
    %c0_5 = arith.constant 0 : index
    %5 = vector.load %arg3[%c0_3, %c0_4, %c0_5] : memref<3x16x128xf32, #tpu.memory_space<vmem>>, vector<1x16x128xf32>
    %6 = vector.shape_cast %5 : vector<1x16x128xf32> to vector<16x128xf32>
    %c1 = arith.constant 1 : index
    %c0_6 = arith.constant 0 : index
    %c0_7 = arith.constant 0 : index
    %7 = vector.load %arg2[%c1, %c0_6, %c0_7] : memref<3x16x128xf32, #tpu.memory_space<vmem>>, vector<1x16x128xf32>
    %8 = vector.shape_cast %7 : vector<1x16x128xf32> to vector<16x128xf32>
    %c1_8 = arith.constant 1 : index
    %c0_9 = arith.constant 0 : index
    %c0_10 = arith.constant 0 : index
    %9 = vector.load %arg3[%c1_8, %c0_9, %c0_10] : memref<3x16x128xf32, #tpu.memory_space<vmem>>, vector<1x16x128xf32>
    %10 = vector.shape_cast %9 : vector<1x16x128xf32> to vector<16x128xf32>
    %c2 = arith.constant 2 : index
    %c0_11 = arith.constant 0 : index
    %c0_12 = arith.constant 0 : index
    %11 = vector.load %arg2[%c2, %c0_11, %c0_12] : memref<3x16x128xf32, #tpu.memory_space<vmem>>, vector<1x16x128xf32>
    %12 = vector.shape_cast %11 : vector<1x16x128xf32> to vector<16x128xf32>
    %c2_13 = arith.constant 2 : index
    %c0_14 = arith.constant 0 : index
    %c0_15 = arith.constant 0 : index
    %13 = vector.load %arg3[%c2_13, %c0_14, %c0_15] : memref<3x16x128xf32, #tpu.memory_space<vmem>>, vector<1x16x128xf32>
    %14 = vector.shape_cast %13 : vector<1x16x128xf32> to vector<16x128xf32>
    %cst = arith.constant 1.000000e+00 : f32
    %15 = vector.broadcast %cst : f32 to vector<16x128xf32>
    %16 = arith.addf %4, %15 : vector<16x128xf32>
    %cst_16 = arith.constant 5.000000e+01 : f32
    %17 = vector.broadcast %cst_16 : f32 to vector<16x128xf32>
    %18 = arith.mulf %16, %17 : vector<16x128xf32>
    %cst_17 = arith.constant 0.000000e+00 : f32
    %19 = vector.broadcast %cst_17 : f32 to vector<16x128xf32>
    %20 = arith.addf %18, %19 : vector<16x128xf32>
    %cst_18 = arith.constant 1.000000e+00 : f32
    %21 = vector.broadcast %cst_18 : f32 to vector<16x128xf32>
    %22 = arith.addf %6, %21 : vector<16x128xf32>
    %cst_19 = arith.constant 5.000000e+01 : f32
    %23 = vector.broadcast %cst_19 : f32 to vector<16x128xf32>
    %24 = arith.mulf %22, %23 : vector<16x128xf32>
    %cst_20 = arith.constant 0.000000e+00 : f32
    %25 = vector.broadcast %cst_20 : f32 to vector<16x128xf32>
    %26 = arith.addf %24, %25 : vector<16x128xf32>
    %27 = arith.subf %8, %10 : vector<16x128xf32>
    %cst_21 = arith.constant 3.14159274 : f32
    %28 = vector.broadcast %cst_21 : f32 to vector<16x128xf32>
    %29 = arith.mulf %27, %28 : vector<16x128xf32>
    %30 = arith.subf %12, %14 : vector<16x128xf32>
    %cst_22 = arith.constant 3.000000e+02 : f32
    %31 = vector.broadcast %cst_22 : f32 to vector<16x128xf32>
    %32 = arith.mulf %30, %31 : vector<16x128xf32>
    %33 = arith.mulf %20, %20 : vector<16x128xf32>
    %34 = arith.mulf %26, %26 : vector<16x128xf32>
    %35 = arith.addf %33, %34 : vector<16x128xf32>
    %36 = arith.mulf %20, %26 : vector<16x128xf32>
    %cst_23 = arith.constant 2.000000e+00 : f32
    %37 = vector.broadcast %cst_23 : f32 to vector<16x128xf32>
    %38 = arith.mulf %37, %36 : vector<16x128xf32>
    %39 = math.cos %29 : vector<16x128xf32>
    %40 = arith.mulf %38, %39 : vector<16x128xf32>
    %41 = arith.subf %35, %40 : vector<16x128xf32>
    %42 = arith.mulf %32, %32 : vector<16x128xf32>
    %43 = arith.addf %41, %42 : vector<16x128xf32>
    %c0_24 = arith.constant 0 : index
    %c0_25 = arith.constant 0 : index
    %44 = vector.load %arg5[%c0_24, %c0_25] : memref<1x128xf32, #tpu.memory_space<vmem>>, vector<1x128xf32>
    %cst_26 = arith.constant dense<0.000000e+00> : vector<128xf32>
    %45 = vector.multi_reduction <add>, %43, %cst_26 [0] : vector<16x128xf32> to vector<128xf32>
    %46 = vector.shape_cast %45 : vector<128xf32> to vector<1x128xf32>
    %47 = arith.addf %44, %46 : vector<1x128xf32>
    %c0_27 = arith.constant 0 : index
    %c0_28 = arith.constant 0 : index
    %48 = vector.load %arg5[%c0_27, %c0_28] : memref<1x128xf32, #tpu.memory_space<vmem>>, vector<1x128xf32>
    tpu.vector_store %arg5[%c0_27, %c0_28], %47 {strides = array<i32>} : memref<1x128xf32, #tpu.memory_space<vmem>>, vector<1x128xf32>,
    %c0_i32_29 = arith.constant 0 : i32
    %49 = arith.cmpi eq, %arg1, %c0_i32_29 : i32
    %50 = arith.extui %49 : i1 to i32
    %c0_i32_30 = arith.constant 0 : i32
    %51 = arith.cmpi ne, %50, %c0_i32_30 : i32
    scf.if %51 {
      %c0_31 = arith.constant 0 : index
      %c0_32 = arith.constant 0 : index
      %52 = vector.load %arg5[%c0_31, %c0_32] : memref<1x128xf32, #tpu.memory_space<vmem>>, vector<1x128xf32>
      %cst_33 = arith.constant 0.0416666679 : f32
      %53 = vector.broadcast %cst_33 : f32 to vector<1x128xf32>
      %54 = arith.mulf %52, %53 : vector<1x128xf32>
      %c0_34 = arith.constant 0 : index
      %c0_35 = arith.constant 0 : index
      %c0_36 = arith.constant 0 : index
      %55 = vector.load %arg4[%c0_34, %c0_35, %c0_36] : memref<1x1x128xf32, #tpu.memory_space<vmem>>, vector<1x1x128xf32>
      %56 = vector.shape_cast %55 : vector<1x1x128xf32> to vector<1x128xf32>
      %57 = vector.shape_cast %54 : vector<1x128xf32> to vector<1x1x128xf32>
      tpu.vector_store %arg4[%c0_34, %c0_35, %c0_36], %57 {strides = array<i32>} : memref<1x1x128xf32, #tpu.memory_space<vmem>>, vector<1x1x128xf32>,
    } else {
    }
    return
  }
  func.func @transform_0(%arg0: i32, %arg1: i32) -> (i32, i32, i32) {
    %c1_i32 = arith.constant 1 : i32
    %0 = arith.muli %arg0, %c1_i32 : i32
    %1 = arith.addi %0, %arg1 : i32
    %c0_i32 = arith.constant 0 : i32
    %c0_i32_0 = arith.constant 0 : i32
    %c0_i32_1 = arith.constant 0 : i32
    return %c0_i32, %1, %c0_i32_0 : i32, i32, i32
  }
  func.func @transform_1(%arg0: i32, %arg1: i32) -> (i32, i32, i32) {
    %c1_i32 = arith.constant 1 : i32
    %0 = arith.muli %arg0, %c1_i32 : i32
    %1 = arith.addi %0, %arg1 : i32
    %c0_i32 = arith.constant 0 : i32
    %c0_i32_0 = arith.constant 0 : i32
    %c0_i32_1 = arith.constant 0 : i32
    return %c0_i32, %1, %c0_i32_0 : i32, i32, i32
  }
  func.func @transform_2(%arg0: i32, %arg1: i32) -> (i32, i32, i32) {
    %c0_i32 = arith.constant 0 : i32
    %c0_i32_0 = arith.constant 0 : i32
    %c0_i32_1 = arith.constant 0 : i32
    return %arg0, %c0_i32, %c0_i32_0 : i32, i32, i32
  }
}

</mosaic_0001>

<llo_original>
// kernel: tpu_custom_call.1
$region0: #{tpu_custom_call.1}
  #allocation0 [shape = 'u32[]', space=smem, size = 0x4, offset = 0x4, fixed_abs, tag = 'smem constant byte address 0x4 - core index']
  #allocation1 [shape = 'u32[144,128]{1,0:T(1,128)}', space=vmem, size = 0x12000, scoped, tag = 'internal scratch']
  #allocation2 [shape = 'f32[1,128]{1,0:T(1,128)}', space=vmem, size = 0x200, scoped, tag = 'scratch operand']
  %s0 = inlined_call_operand.hbm [shape: f32[3,16,128], index: 0, kind: input, shape index: {}]
  %s1 = inlined_call_operand.hbm [shape: f32[3,16,128], index: 1, kind: input, shape index: {}]
  %s2 = inlined_call_operand.hbm [shape: f32[1,1,128], index: 2, kind: output, shape index: {}]
  %s3 = sld [smem:[#allocation0]]
  $region34: #{tpu_custom_call.1} parent=0
    _
  %s5 = ssub.s32 1, %s3
  %s6 = scalar_select 0, %s5, %s3
  $region1: #{tpu_custom_call.1} parent=0
    #allocation3 [shape = 'u8[24576]{0}', space=vmem, size = 0x6000, scoped, tag = 'input window, operand 0, single buffered']
    #allocation4 [shape = 's32[1]{0}', space=sflag, size = 0x4, scoped, tag = 'scoped memory for tpu_custom_call.1']
    #allocation5 [shape = 's32[1]{0}', space=sflag, size = 0x4, scoped, tag = 'scoped memory for tpu_custom_call.1']
    #allocation6 [shape = 'u8[24576]{0}', space=vmem, size = 0x6000, scoped, tag = 'input window, operand 1, single buffered']
    #allocation7 [shape = 's32[1]{0}', space=sflag, size = 0x4, scoped, tag = 'scoped memory for tpu_custom_call.1']
    #allocation8 [shape = 'u8[512]{0}', space=vmem, size = 0x400, scoped, tag = 'output window, operand 0, single buffered']
    %7 = vsyncpa [#allocation4], 0
    %8 = vsyncpa [#allocation7], 0
    %9 = vsyncpa [#allocation5], 0
    // Predicated region
    $region2: #{tpu_custom_call.1} parent=1 // pred_check
      _
    $region3: #{tpu_custom_call.1} parent=1 // pred_check_branch
      %11 = sbr.rel (0) target = $region5
    $region4: #{tpu_custom_call.1} parent=1 // pred_region
      %s12 = sadd.s32 0, 0
      %s13 = smul.u32 2, %s12
      %s15 = ssub.s32 768, 768
      %16 = vsyncadd [#allocation4], %s15
      %s17 = smul.addr %s13, 128
      %s18 = scalar_lea.hbm %s0, %s17
      %s19 = sshll.u32 [#allocation3], 4
      %s20 = int_to_ptr.vmem [resolvable:$true] %s19
      %25 = dma.hbm_to_vmem [thread:$0]  %s18, 768, %s20, [#allocation4], 128, 128, 8
    $region5: #{tpu_custom_call.1} parent=1 // pred_fallthru
      _
    // Predicated region
    $region6: #{tpu_custom_call.1} parent=1 // pred_check
      _
    $region7: #{tpu_custom_call.1} parent=1 // pred_check_branch
      %27 = sbr.rel (0) target = $region9
    $region8: #{tpu_custom_call.1} parent=1 // pred_region
      %s28 = sadd.s32 0, 0
      %s29 = smul.u32 2, %s28
      %s31 = ssub.s32 768, 768
      %32 = vsyncadd [#allocation7], %s31
      %s33 = smul.addr %s29, 128
      %s34 = scalar_lea.hbm %s1, %s33
      %s35 = sshll.u32 [#allocation6], 4
      %s36 = int_to_ptr.vmem [resolvable:$true] %s35
      %41 = dma.hbm_to_vmem [thread:$0]  %s34, 768, %s36, [#allocation7], 128, 128, 8
    $region9: #{tpu_custom_call.1} parent=1 // pred_fallthru
      _
    // Predicated region
    $region10: #{tpu_custom_call.1} parent=1 // pred_check
      _
    $region11: #{tpu_custom_call.1} parent=1 // pred_check_branch
      %43 = sbr.rel (0) target = $region13
    $region12: #{tpu_custom_call.1} parent=1 // pred_region
      %44 = dma.done [#allocation4], 768
    $region13: #{tpu_custom_call.1} parent=1 // pred_fallthru
      _
    // Predicated region
    $region14: #{tpu_custom_call.1} parent=1 // pred_check
      _
    $region15: #{tpu_custom_call.1} parent=1 // pred_check_branch
      %46 = sbr.rel (0) target = $region17
    $region16: #{tpu_custom_call.1} parent=1 // pred_region
      %47 = dma.done [#allocation7], 768
    $region17: #{tpu_custom_call.1} parent=1 // pred_fallthru
      _
    %s48 = sadd.s32 0, 0
    %s49 = smul.u32 2, %s48
    %s50 = sadd.s32 0, 0
    %s51 = smul.u32 2, %s50
    %p52 = scmp.eq.s32.totalorder 0, 0
    // Predicated region
    $region18: #{tpu_custom_call.1} parent=1 // pred_check
      %p53 = pneg %p52
    $region19: #{tpu_custom_call.1} parent=1 // pred_check_branch
      %55 = sbr.rel (%p53) target = $region21
    $region20: #{tpu_custom_call.1} parent=1 // pred_region
      %56 = vst [vmem:[#allocation2] sm:$0x1] 0.0
    $region21: #{tpu_custom_call.1} parent=1 // pred_fallthru
      _
    %v57 = vld [vmem:[#allocation3] sm:$0xff]
    %v58 = vld [vmem:[#allocation3 + $0x8] sm:$0xff]
    %v59 = vld [vmem:[#allocation6] sm:$0xff]
    %v60 = vld [vmem:[#allocation6 + $0x8] sm:$0xff]
    %s61 = scalar_lea.vmem [#allocation3], 16
    %v62 = vld [vmem:[%s61] sm:$0xff]
    %v63 = vld [vmem:[%s61 + $0x8] sm:$0xff]
    %s64 = scalar_lea.vmem [#allocation6], 16
    %v65 = vld [vmem:[%s64] sm:$0xff]
    %v66 = vld [vmem:[%s64 + $0x8] sm:$0xff]
    %s67 = scalar_lea.vmem [#allocation3], 32
    %v68 = vld [vmem:[%s67] sm:$0xff]
    %v69 = vld [vmem:[%s67 + $0x8] sm:$0xff]
    %s70 = scalar_lea.vmem [#allocation6], 32
    %v71 = vld [vmem:[%s70] sm:$0xff]
    %v72 = vld [vmem:[%s70 + $0x8] sm:$0xff]
    %v73 = vadd.f32 %v57, 1.0
    %v74 = vadd.f32 %v58, 1.0
    %v75 = vmul.f32 %v73, 50.0
    %v76 = vmul.f32 %v74, 50.0
    %v77 = vadd.f32 %v75, 0.0
    %v78 = vadd.f32 %v76, 0.0
    %v79 = vadd.f32 %v59, 1.0
    %v80 = vadd.f32 %v60, 1.0
    %v81 = vmul.f32 %v79, 50.0
    %v82 = vmul.f32 %v80, 50.0
    %v83 = vadd.f32 %v81, 0.0
    %v84 = vadd.f32 %v82, 0.0
    %v85 = vsub.f32 %v62, %v65
    %v86 = vsub.f32 %v63, %v66
    %v87 = vmul.f32 %v85, 3.1415927
    %v88 = vmul.f32 %v86, 3.1415927
    %v89 = vsub.f32 %v68, %v71
    %v90 = vsub.f32 %v69, %v72
    %v91 = vmul.f32 %v89, 300.0
    %v92 = vmul.f32 %v90, 300.0
    %v93 = vmul.f32 %v77, %v77
    %v94 = vmul.f32 %v78, %v78
    %v95 = vmul.f32 %v83, %v83
    %v96 = vmul.f32 %v84, %v84
    %v97 = vadd.f32 %v93, %v95
    %v98 = vadd.f32 %v94, %v96
    %v99 = vmul.f32 %v77, %v83
    %v100 = vmul.f32 %v78, %v84
    %v101 = vmul.f32 %v99, 2.0
    %v102 = vmul.f32 %v100, 2.0
    %v103 = vand.u32 2147483647, %v87
    %vm104 = vcmp.le.f32.partialorder %v103, 0.7853982
    %vm105 = vcmp.lt.s32.totalorder %v87, 0
    %v106 = vand.u32 %v87, 2139095040
    %v107 = vshrl.u32 %v106, 23
    %v108 = vsub.s32 %v107, 127
    %v109 = vand.u32 2147483647, %v87
    %v110 = vand.u32 %v109, 8388607
    %v111 = vor.u32 %v110, 8388608
    %v112 = vsub.s32 0, %v111
    %v113 = vadd.s32 %v108, 1
    %vm114 = vcmp.gt.s32.totalorder %v113, 0
    %v115 = vsel %vm114, %v113, 0
    %v116 = vshrl.u32 %v115, 5
    %v117 = vand.u32 %v115, 31
    %v118 = vsub.s32 32, %v117
    %v119 = vshrl.u32 683565275, %v118
    %v120 = vshll.u32 683565275, %v117
    %v121 = vshrl.u32 2475754826, %v118
    %v122 = vor.u32 %v120, %v121
    %v123 = vshll.u32 2475754826, %v117
    %v124 = vshrl.u32 2131351028, %v118
    %v125 = vor.u32 %v123, %v124
    %v126 = vshll.u32 2131351028, %v117
    %v127 = vshrl.u32 2102212464, %v118
    %v128 = vor.u32 %v126, %v127
    %v129 = vshll.u32 2102212464, %v117
    %v130 = vshrl.u32 920167782, %v118
    %v131 = vor.u32 %v129, %v130
    %v132 = vshll.u32 920167782, %v117
    %v133 = vshrl.u32 1326507024, %v118
    %v134 = vor.u32 %v132, %v133
    %vm135 = vcmp.lt.s32.totalorder %v116, 1
    %vm136 = vcmp.lt.s32.totalorder %v116, 2
    %vm137 = vcmp.lt.s32.totalorder %v116, 3
    %vm138 = vcmp.lt.s32.totalorder %v116, 4
    %v139 = vsel %vm135, %v119, %v122
    %v140 = vsel %vm138, %v128, 2102212464
    %v141 = vsel %vm137, %v125, %v140
    %v142 = vsel %vm136, %v139, %v141
    %v143 = vsel %vm135, %v122, %v125
    %v144 = vsel %vm138, %v131, 920167782
    %v145 = vsel %vm137, %v128, %v144
    %v146 = vsel %vm136, %v143, %v145
    %v147 = vsel %vm135, %v125, %v128
    %v148 = vsel %vm138, %v134, 1326507024
    %v149 = vsel %vm137, %v131, %v148
    %v150 = vsel %vm136, %v147, %v149
    %v151 = vshll.u32 %v111, 8
    %v152 = vmul.u32.u64.compose %v151, %v150
    %v153 = vextract.low.u32 %v152
    %v154 = vextract.high.u32 %v152
    %v155 = vmul.u32.u64.compose %v151, %v146
    %v156 = vextract.low.u32 %v155
    %v157 = vextract.high.u32 %v155
    %v158 = vmul.u32 %v151, %v142
    %v159 = vadd.s32 %v154, %v156
    %vm160 = vc.u32 %v154, %v156
    %v161 = vadd.s32 %v157, 1
    %v162 = vsel %vm160, %v161, %v157
    %v163 = vadd.s32 %v158, %v162
    %v164 = vadd.s32 %v163, 536870912
    %v165 = vshrl.u32 %v164, 30
    %v166 = vshll.u32 %v165, 30
    %v167 = vsub.s32 %v163, %v166
    %vm168 = vcmp.lt.s32.totalorder %v167, 0
    %v169 = vsub.s32 0, %v167
    %v170 = vsel %vm168, %v169, %v167
    %v171 = vclz %v170
    %v172 = vsub.s32 %v171, 2
    %vm173 = vcmp.gt.s32.totalorder 0, %v172
    %v174 = vsel %vm173, 0, %v172
    %v175 = vsub.s32 32, %v174
    %v176 = vshll.u32 %v167, %v174
    %v177 = vshrl.u32 %v159, %v175
    %v178 = vor.u32 %v176, %v177
    %v179 = vsub.s32 4294967266, %v174
    %v180 = vadd.s32 %v179, 127
    %v181 = vshll.u32 %v180, 23
    %v182 = vor.u32 4788187, %v181
    %v183 = vand.u32 2147483647, %v182
    %v185 = vcvt.s32.f32 %v178
    %v186 = vmul.f32 %v185, %v183
    %v187 = vxor.u32 %v186, 2147483648
    %v188 = vsel %vm105, %v187, %v186
    %v189 = vsub.s32 4, %v165
    %v190 = vsel %vm105, %v189, %v165
    %v191 = vsel %vm104, %v87, %v188
    %v192 = vsel %vm104, 0, %v190
    %v193 = vcosq.f32.pop %v191
    %v194 = vsinq.f32.pop %v191
    %vm195 = vweird.f32 %v87
    %v196 = vand.u32 %v192, 3
    %vm197 = vcmp.lt.s32.totalorder %v196, 2
    %vm198 = vcmp.eq.s32.totalorder %v196, 0
    %v199 = vxor.u32 %v194, 2147483648
    %v200 = vsel %vm198, %v193, %v199
    %vm201 = vcmp.eq.s32.totalorder %v196, 2
    %v202 = vxor.u32 %v193, 2147483648
    %v203 = vsel %vm201, %v202, %v194
    %v204 = vsel %vm197, %v200, %v203
    %v205 = vsel %vm195, nan, %v204
    %v206 = vand.u32 2147483647, %v88
    %vm207 = vcmp.le.f32.partialorder %v206, 0.7853982
    %vm208 = vcmp.lt.s32.totalorder %v88, 0
    %v209 = vand.u32 %v88, 2139095040
    %v210 = vshrl.u32 %v209, 23
    %v211 = vsub.s32 %v210, 127
    %v212 = vand.u32 2147483647, %v88
    %v213 = vand.u32 %v212, 8388607
    %v214 = vor.u32 %v213, 8388608
    %v215 = vsub.s32 0, %v214
    %v216 = vadd.s32 %v211, 1
    %vm217 = vcmp.gt.s32.totalorder %v216, 0
    %v218 = vsel %vm217, %v216, 0
    %v219 = vshrl.u32 %v218, 5
    %v220 = vand.u32 %v218, 31
    %v221 = vsub.s32 32, %v220
    %v222 = vshrl.u32 683565275, %v221
    %v223 = vshll.u32 683565275, %v220
    %v224 = vshrl.u32 2475754826, %v221
    %v225 = vor.u32 %v223, %v224
    %v226 = vshll.u32 2475754826, %v220
    %v227 = vshrl.u32 2131351028, %v221
    %v228 = vor.u32 %v226, %v227
    %v229 = vshll.u32 2131351028, %v220
    %v230 = vshrl.u32 2102212464, %v221
    %v231 = vor.u32 %v229, %v230
    %v232 = vshll.u32 2102212464, %v220
    %v233 = vshrl.u32 920167782, %v221
    %v234 = vor.u32 %v232, %v233
    %v235 = vshll.u32 920167782, %v220
    %v236 = vshrl.u32 1326507024, %v221
    %v237 = vor.u32 %v235, %v236
    %vm238 = vcmp.lt.s32.totalorder %v219, 1
    %vm239 = vcmp.lt.s32.totalorder %v219, 2
    %vm240 = vcmp.lt.s32.totalorder %v219, 3
    %vm241 = vcmp.lt.s32.totalorder %v219, 4
    %v242 = vsel %vm238, %v222, %v225
    %v243 = vsel %vm241, %v231, 2102212464
    %v244 = vsel %vm240, %v228, %v243
    %v245 = vsel %vm239, %v242, %v244
    %v246 = vsel %vm238, %v225, %v228
    %v247 = vsel %vm241, %v234, 920167782
    %v248 = vsel %vm240, %v231, %v247
    %v249 = vsel %vm239, %v246, %v248
    %v250 = vsel %vm238, %v228, %v231
    %v251 = vsel %vm241, %v237, 1326507024
    %v252 = vsel %vm240, %v234, %v251
    %v253 = vsel %vm239, %v250, %v252
    %v254 = vshll.u32 %v214, 8
    %v255 = vmul.u32.u64.compose %v254, %v253
    %v256 = vextract.low.u32 %v255
    %v257 = vextract.high.u32 %v255
    %v258 = vmul.u32.u64.compose %v254, %v249
    %v259 = vextract.low.u32 %v258
    %v260 = vextract.high.u32 %v258
    %v261 = vmul.u32 %v254, %v245
    %v262 = vadd.s32 %v257, %v259
    %vm263 = vc.u32 %v257, %v259
    %v264 = vadd.s32 %v260, 1
    %v265 = vsel %vm263, %v264, %v260
    %v266 = vadd.s32 %v261, %v265
    %v267 = vadd.s32 %v266, 536870912
    %v268 = vshrl.u32 %v267, 30
    %v269 = vshll.u32 %v268, 30
    %v270 = vsub.s32 %v266, %v269
    %vm271 = vcmp.lt.s32.totalorder %v270, 0
    %v272 = vsub.s32 0, %v270
    %v273 = vsel %vm271, %v272, %v270
    %v274 = vclz %v273
    %v275 = vsub.s32 %v274, 2
    %vm276 = vcmp.gt.s32.totalorder 0, %v275
    %v277 = vsel %vm276, 0, %v275
    %v278 = vsub.s32 32, %v277
    %v279 = vshll.u32 %v270, %v277
    %v280 = vshrl.u32 %v262, %v278
    %v281 = vor.u32 %v279, %v280
    %v282 = vsub.s32 4294967266, %v277
    %v283 = vadd.s32 %v282, 127
    %v284 = vshll.u32 %v283, 23
    %v285 = vor.u32 4788187, %v284
    %v286 = vand.u32 2147483647, %v285
    %v288 = vcvt.s32.f32 %v281
    %v289 = vmul.f32 %v288, %v286
    %v290 = vxor.u32 %v289, 2147483648
    %v291 = vsel %vm208, %v290, %v289
    %v292 = vsub.s32 4, %v268
    %v293 = vsel %vm208, %v292, %v268
    %v294 = vsel %vm207, %v88, %v291
    %v295 = vsel %vm207, 0, %v293
    %v296 = vcosq.f32.pop %v294
    %v297 = vsinq.f32.pop %v294
    %vm298 = vweird.f32 %v88
    %v299 = vand.u32 %v295, 3
    %vm300 = vcmp.lt.s32.totalorder %v299, 2
    %vm301 = vcmp.eq.s32.totalorder %v299, 0
    %v302 = vxor.u32 %v297, 2147483648
    %v303 = vsel %vm301, %v296, %v302
    %vm304 = vcmp.eq.s32.totalorder %v299, 2
    %v305 = vxor.u32 %v296, 2147483648
    %v306 = vsel %vm304, %v305, %v297
    %v307 = vsel %vm300, %v303, %v306
    %v308 = vsel %vm298, nan, %v307
    %v309 = vmul.f32 %v101, %v205
    %v310 = vmul.f32 %v102, %v308
    %v311 = vsub.f32 %v97, %v309
    %v312 = vsub.f32 %v98, %v310
    %v313 = vmul.f32 %v91, %v91
    %v314 = vmul.f32 %v92, %v92
    %v315 = vadd.f32 %v311, %v313
    %v316 = vadd.f32 %v312, %v314
    %v317 = vld [vmem:[#allocation2] sm:$0x1]
    %v318 = vadd.f32 %v315, %v316
    %v319 = vrot.slane %v318, 4
    %v320 = vadd.f32 %v318, %v319
    %v321 = vrot.slane %v320, 2
    %v322 = vadd.f32 %v320, %v321
    %v323 = vrot.slane %v322, 1
    %v324 = vadd.f32 %v322, %v323
    %v325 = vadd.f32 %v317, %v324
    %326 = vst [vmem:[#allocation2] sm:$0x1] %v325
    // Predicated region
    $region22: #{tpu_custom_call.1} parent=1 // pred_check
      %p327 = pneg %p52
    $region23: #{tpu_custom_call.1} parent=1 // pred_check_branch
      %329 = sbr.rel (%p327) target = $region25
    $region24: #{tpu_custom_call.1} parent=1 // pred_region
      %v330 = vld [vmem:[#allocation2] sm:$0x1]
      %v331 = vmul.f32 %v330, 0.041666668
      %332 = vst [vmem:[#allocation8] sm:$0x1] %v331
    $region25: #{tpu_custom_call.1} parent=1 // pred_fallthru
      _
    // Predicated region
    $region26: #{tpu_custom_call.1} parent=1 // pred_check
      _
    $region27: #{tpu_custom_call.1} parent=1 // pred_check_branch
      %334 = sbr.rel (0) target = $region29
    $region28: #{tpu_custom_call.1} parent=1 // pred_region
      %s336 = ssub.s32 16, 16
      %337 = vsyncadd [#allocation5], %s336
      %s339 = sshll.u32 [#allocation8], 4
      %s340 = int_to_ptr.vmem [resolvable:$true] %s339
      %342 = dma.vmem_to_hbm [thread:$0]  %s340, 16, %s2, [#allocation5]
    $region29: #{tpu_custom_call.1} parent=1 // pred_fallthru
      _
    // Predicated region
    $region30: #{tpu_custom_call.1} parent=1 // pred_check
      _
    $region31: #{tpu_custom_call.1} parent=1 // pred_check_branch
      %344 = sbr.rel (0) target = $region33
    $region32: #{tpu_custom_call.1} parent=1 // pred_region
      %345 = dma.done [#allocation5], 16
    $region33: #{tpu_custom_call.1} parent=1 // pred_fallthru
      _
    %346 = vsyncpa [#allocation4], 1
    %347 = vsyncpa [#allocation7], 1
    %348 = vsyncpa [#allocation5], 1

</llo_original>
